<compile_context>
chip_gen: v6e
topology: v6e:2x2x1
jax: 0.10.0
libtpu: 0.0.40
codegen_flags: <defaults>
</compile_context>

<pallas_src>
import functools
import math

import jax
import jax.numpy as jnp
from jax.experimental import pallas as pl
from jax.experimental.pallas import tpu as pltpu


# ----------------------------- Pallas kernels ------------------------------ #

def _pathway_mlp1_kernel(x_ref, w1_ref, b1_ref, w2_ref, b2_ref, o_ref, *,
                         negative_slope):
    """One pathway, one batch tile:  Linear -> LeakyReLU -> Linear."""
    x = x_ref[...].astype(jnp.float32)                           # (TB, F)
    h = jnp.dot(x, w1_ref[...].astype(jnp.float32),
                preferred_element_type=jnp.float32)
    h = h + b1_ref[...].astype(jnp.float32)                      # (TB, H)
    h = jnp.where(h > 0, h, negative_slope * h)                  # LeakyReLU
    o = jnp.dot(h, w2_ref[...].astype(jnp.float32),
                preferred_element_type=jnp.float32)
    o = o + b2_ref[...].astype(jnp.float32)                      # (TB, O)
    o_ref[...] = o.astype(o_ref.dtype)


def _pathway_linear_kernel(x_ref, w_ref, b_ref, o_ref):
    """One pathway, one batch tile: single Linear (n_layers == 0)."""
    x = x_ref[...].astype(jnp.float32)
    o = jnp.dot(x, w_ref[...].astype(jnp.float32),
                preferred_element_type=jnp.float32)
    o = o + b_ref[...].astype(jnp.float32)
    o_ref[...] = o.astype(o_ref.dtype)


# ------------------------------ wrappers ----------------------------------- #

def _batch_tile(batch, block_b):
    if batch <= block_b:
        return batch
    return max(8, (block_b // 8) * 8)   # keep tiles sublane (8) aligned


def pathway_mlp1_forward(x, w1, b1, w2, b2, *, negative_slope=0.01,
                         block_b=512, vmem_limit_bytes=32 * 1024 * 1024):
    """x: (B, F, P) -> (B, O, P); independent 2-layer MLP per pathway."""
    B, F, P = x.shape
    H = w1.shape[-1]
    O = w2.shape[-1]
    tb = _batch_tile(B, block_b)
    x_t = jnp.transpose(x, (2, 0, 1))                            # (P, B, F)

    grid = (P, pl.cdiv(B, tb))
    flops = 2 * B * P * (F * H + H * O)
    bytes_accessed = 4 * (B * F * P + P * (F * H + H + H * O + O) + B * O * P)

    out = pl.pallas_call(
        functools.partial(_pathway_mlp1_kernel, negative_slope=negative_slope),
        out_shape=jax.ShapeDtypeStruct((P, B, O), x.dtype),
        grid_spec=pltpu.PrefetchScalarGridSpec(
            num_scalar_prefetch=0,
            grid=grid,
            in_specs=[
                pl.BlockSpec((None, tb, F), lambda p, i: (p, i, 0)),
                pl.BlockSpec((None, F, H), lambda p, i: (p, 0, 0)),
                pl.BlockSpec((None, 1, H), lambda p, i: (p, 0, 0)),
                pl.BlockSpec((None, H, O), lambda p, i: (p, 0, 0)),
                pl.BlockSpec((None, 1, O), lambda p, i: (p, 0, 0)),
            ],
            out_specs=pl.BlockSpec((None, tb, O), lambda p, i: (p, i, 0)),
        ),
        compiler_params=pltpu.CompilerParams(
            dimension_semantics=("parallel", "parallel"),
            vmem_limit_bytes=vmem_limit_bytes),
        cost_estimate=pl.CostEstimate(flops=flops, transcendentals=0,
                                      bytes_accessed=bytes_accessed),
    )(x_t, w1, b1, w2, b2)
    return jnp.transpose(out, (1, 2, 0))                         # (B, O, P)


def pathway_linear_forward(x, w, b, *, block_b=512,
                           vmem_limit_bytes=32 * 1024 * 1024):
    """x: (B, F, P) -> (B, O, P); independent single Linear per pathway."""
    B, F, P = x.shape
    O = w.shape[-1]
    tb = _batch_tile(B, block_b)
    x_t = jnp.transpose(x, (2, 0, 1))                            # (P, B, F)

    grid = (P, pl.cdiv(B, tb))
    flops = 2 * B * P * F * O
    bytes_accessed = 4 * (B * F * P + P * (F * O + O) + B * O * P)

    out = pl.pallas_call(
        _pathway_linear_kernel,
        out_shape=jax.ShapeDtypeStruct((P, B, O), x.dtype),
        grid_spec=pltpu.PrefetchScalarGridSpec(
            num_scalar_prefetch=0,
            grid=grid,
            in_specs=[
                pl.BlockSpec((None, tb, F), lambda p, i: (p, i, 0)),
                pl.BlockSpec((None, F, O), lambda p, i: (p, 0, 0)),
                pl.BlockSpec((None, 1, O), lambda p, i: (p, 0, 0)),
            ],
            out_specs=pl.BlockSpec((None, tb, O), lambda p, i: (p, i, 0)),
        ),
        compiler_params=pltpu.CompilerParams(
            dimension_semantics=("parallel", "parallel"),
            vmem_limit_bytes=vmem_limit_bytes),
        cost_estimate=pl.CostEstimate(flops=flops, transcendentals=0,
                                      bytes_accessed=bytes_accessed),
    )(x_t, w, b)
    return jnp.transpose(out, (1, 2, 0))                         # (B, O, P)


# --------------------------- module (JAX port) ------------------------------ #

def _xavier_uniform(key, shape, fan_in, fan_out):
    bound = math.sqrt(6.0 / (fan_in + fan_out))
    return jax.random.uniform(key, shape, jnp.float32, -bound, bound)


def _linear_bias(key, shape, fan_in):
    bound = 1.0 / math.sqrt(fan_in)
    return jax.random.uniform(key, shape, jnp.float32, -bound, bound)


class PathwayMLP:
    """JAX/Pallas port of presage.PathwayMLP (n_layers in {0, 1}, no BN)."""

    def __init__(self, in_dim, out_dim, hidden_dim, n_layers, batch_norm,
                 n_pathways, config, key):
        if batch_norm:
            # TODO(synk): BatchNorm1d (running stats / train-eval modes) not ported.
            raise NotImplementedError("batch_norm=True not supported in Pallas port")
        if n_layers not in (0, 1):
            # TODO(synk): n_layers >= 2 deep per-pathway MLP stacks not ported.
            raise NotImplementedError("pathway_item_nlayers >= 2 not supported")
        self.n_layers = n_layers
        self.negative_slope = 0.01  # PyTorch LeakyReLU default
        if n_layers == 0:
            kw, kb = jax.random.split(key)
            self.w = _xavier_uniform(kw, (n_pathways, in_dim, out_dim), in_dim, out_dim)
            self.b = _linear_bias(kb, (n_pathways, 1, out_dim), in_dim)
        else:
            k1w, k1b, k2w, k2b = jax.random.split(key, 4)
            self.w1 = _xavier_uniform(k1w, (n_pathways, in_dim, hidden_dim), in_dim, hidden_dim)
            self.b1 = _linear_bias(k1b, (n_pathways, 1, hidden_dim), in_dim)
            self.w2 = _xavier_uniform(k2w, (n_pathways, hidden_dim, out_dim), hidden_dim, out_dim)
            self.b2 = _linear_bias(k2b, (n_pathways, 1, out_dim), hidden_dim)

    def __call__(self, pathway_tensor):
        if self.n_layers == 0:
            return pathway_linear_forward(pathway_tensor, self.w, self.b)
        return pathway_mlp1_forward(pathway_tensor, self.w1, self.b1,
                                    self.w2, self.b2,
                                    negative_slope=self.negative_slope)


class GeneEmbeddingTransformation:
    """JAX/Pallas port of presage.GeneEmbeddingTransformation."""

    def __init__(self, gene_embeddings, config, transformation_type, key):
        transformations = {'MLP': PathwayMLP}
        ngenes, n_feature_in, n_pathways = gene_embeddings.shape
        self.transformation_obj = transformations[transformation_type](
            n_feature_in, config['item_hidden_size'],
            config['pathway_item_hidden_size'], config['pathway_item_nlayers'],
            config['batch_norm'], n_pathways, config, key)

    def __call__(self, tensor):
        return self.transformation_obj(tensor)


# ------------------------------- references --------------------------------- #

def _reference_mlp1(x, w1, b1, w2, b2, negative_slope=0.01):
    # x: (B, F, P) -> (B, O, P), pure-JAX reference
    h = jnp.einsum('bfp,pfh->pbh', x, w1) + b1                   # (P, B, H)
    h = jnp.where(h > 0, h, negative_slope * h)
    o = jnp.einsum('pbh,pho->pbo', h, w2) + b2                   # (P, B, O)
    return jnp.transpose(o, (1, 2, 0))


def _reference_linear(x, w, b):
    o = jnp.einsum('bfp,pfo->pbo', x, w) + b                     # (P, B, O)
    return jnp.transpose(o, (1, 2, 0))


# ---------------------------------- main ------------------------------------ #

if __name__ == "__main__":
    key = jax.random.PRNGKey(0)
    k_param, k_param0, k_x = jax.random.split(key, 3)

    # small shapes: ngenes (batch) = 16, n_feature_in = 8, n_pathways = 4
    ngenes, n_feature_in, n_pathways = 16, 8, 4
    config = {'item_hidden_size': 32, 'pathway_item_hidden_size': 16,
              'pathway_item_nlayers': 1, 'batch_norm': False}

    gene_embeddings = jax.random.normal(
        k_x, (ngenes, n_feature_in, n_pathways), dtype=jnp.float32)

    # n_layers == 1 path (Linear -> LeakyReLU -> Linear per pathway)
    model = GeneEmbeddingTransformation(gene_embeddings, config, 'MLP', k_param)
    out = jax.block_until_ready(model(gene_embeddings))
    assert out.shape == (ngenes, config['item_hidden_size'], n_pathways)

    mlp = model.transformation_obj
    ref = _reference_mlp1(gene_embeddings, mlp.w1, mlp.b1, mlp.w2, mlp.b2)
    assert jnp.allclose(out, ref, atol=1e-5, rtol=1e-5), "mismatch (n_layers=1)"

    # n_layers == 0 path (single Linear per pathway)
    config0 = dict(config, pathway_item_nlayers=0)
    model0 = GeneEmbeddingTransformation(gene_embeddings, config0, 'MLP', k_param0)
    out0 = jax.block_until_ready(model0(gene_embeddings))
    ref0 = _reference_linear(gene_embeddings, model0.transformation_obj.w,
                             model0.transformation_obj.b)
    assert out0.shape == (ngenes, config['item_hidden_size'], n_pathways)
    assert jnp.allclose(out0, ref0, atol=1e-5, rtol=1e-5), "mismatch (n_layers=0)"

    print("KERNEL_OK")
</pallas_src>

<mosaic_0001>
module attributes {stable_mosaic.version = 11 : i64} {
  func.func @_pathway_mlp1_kernel(%arg0: i32, %arg1: i32, %arg2: memref<1x16x8xf32, #tpu.memory_space<vmem>>, %arg3: memref<1x8x16xf32, #tpu.memory_space<vmem>>, %arg4: memref<1x1x16xf32, #tpu.memory_space<vmem>>, %arg5: memref<1x16x32xf32, #tpu.memory_space<vmem>>, %arg6: memref<1x1x32xf32, #tpu.memory_space<vmem>>, %arg7: memref<1x16x32xf32, #tpu.memory_space<vmem>>) attributes {dimension_semantics = [#tpu.dimension_semantics<parallel>, #tpu.dimension_semantics<parallel>], iteration_bounds = array<i64: 4, 1>, scalar_prefetch = 0 : i64, scratch_operands = 0 : i64, tpu.core_type = #tpu.core_type<tc>, window_params = [{transform_indices = @transform_0, window_bounds = array<i64: 1, 16, 8>}, {transform_indices = @transform_1, window_bounds = array<i64: 1, 8, 16>}, {transform_indices = @transform_2, window_bounds = array<i64: 1, 1, 16>}, {transform_indices = @transform_3, window_bounds = array<i64: 1, 16, 32>}, {transform_indices = @transform_4, window_bounds = array<i64: 1, 1, 32>}, {transform_indices = @transform_5, window_bounds = array<i64: 1, 16, 32>}]} {
    %c0 = arith.constant 0 : index
    %c0_0 = arith.constant 0 : index
    %c0_1 = arith.constant 0 : index
    %0 = vector.load %arg2[%c0, %c0_0, %c0_1] : memref<1x16x8xf32, #tpu.memory_space<vmem>>, vector<1x16x8xf32>
    %1 = vector.shape_cast %0 : vector<1x16x8xf32> to vector<16x8xf32>
    %c0_2 = arith.constant 0 : index
    %c0_3 = arith.constant 0 : index
    %c0_4 = arith.constant 0 : index
    %2 = vector.load %arg3[%c0_2, %c0_3, %c0_4] : memref<1x8x16xf32, #tpu.memory_space<vmem>>, vector<1x8x16xf32>
    %3 = vector.shape_cast %2 : vector<1x8x16xf32> to vector<8x16xf32>
    %cst = arith.constant dense<0.000000e+00> : vector<16x16xf32>
    %4 = tpu.matmul %1, %3, %cst {dimension_numbers = #tpu.dot_dimension_numbers<[1], [0], [0], [1], [0, 0, 1, 1], [], []>} : vector<16x8xf32>, vector<8x16xf32>, vector<16x16xf32> -> vector<16x16xf32>
    %c0_5 = arith.constant 0 : index
    %c0_6 = arith.constant 0 : index
    %c0_7 = arith.constant 0 : index
    %5 = vector.load %arg4[%c0_5, %c0_6, %c0_7] : memref<1x1x16xf32, #tpu.memory_space<vmem>>, vector<1x1x16xf32>
    %6 = vector.shape_cast %5 : vector<1x1x16xf32> to vector<1x16xf32>
    %7 = vector.broadcast %6 : vector<1x16xf32> to vector<16x16xf32>
    %8 = arith.addf %4, %7 : vector<16x16xf32>
    %cst_8 = arith.constant 0.000000e+00 : f32
    %9 = vector.broadcast %cst_8 : f32 to vector<16x16xf32>
    %10 = arith.cmpf ogt, %8, %9 : vector<16x16xf32>
    %cst_9 = arith.constant 0.00999999977 : f32
    %11 = vector.broadcast %cst_9 : f32 to vector<16x16xf32>
    %12 = arith.mulf %11, %8 : vector<16x16xf32>
    %13 = arith.select %10, %8, %12 : vector<16x16xi1>, vector<16x16xf32>
    %c0_10 = arith.constant 0 : index
    %c0_11 = arith.constant 0 : index
    %c0_12 = arith.constant 0 : index
    %14 = vector.load %arg5[%c0_10, %c0_11, %c0_12] : memref<1x16x32xf32, #tpu.memory_space<vmem>>, vector<1x16x32xf32>
    %15 = vector.shape_cast %14 : vector<1x16x32xf32> to vector<16x32xf32>
    %cst_13 = arith.constant dense<0.000000e+00> : vector<16x32xf32>
    %16 = tpu.matmul %13, %15, %cst_13 {dimension_numbers = #tpu.dot_dimension_numbers<[1], [0], [0], [1], [0, 0, 1, 1], [], []>} : vector<16x16xf32>, vector<16x32xf32>, vector<16x32xf32> -> vector<16x32xf32>
    %c0_14 = arith.constant 0 : index
    %c0_15 = arith.constant 0 : index
    %c0_16 = arith.constant 0 : index
    %17 = vector.load %arg6[%c0_14, %c0_15, %c0_16] : memref<1x1x32xf32, #tpu.memory_space<vmem>>, vector<1x1x32xf32>
    %18 = vector.shape_cast %17 : vector<1x1x32xf32> to vector<1x32xf32>
    %19 = vector.broadcast %18 : vector<1x32xf32> to vector<16x32xf32>
    %20 = arith.addf %16, %19 : vector<16x32xf32>
    %c0_17 = arith.constant 0 : index
    %c0_18 = arith.constant 0 : index
    %c0_19 = arith.constant 0 : index
    %21 = vector.load %arg7[%c0_17, %c0_18, %c0_19] : memref<1x16x32xf32, #tpu.memory_space<vmem>>, vector<1x16x32xf32>
    %22 = vector.shape_cast %21 : vector<1x16x32xf32> to vector<16x32xf32>
    %23 = vector.shape_cast %20 : vector<16x32xf32> to vector<1x16x32xf32>
    tpu.vector_store %arg7[%c0_17, %c0_18, %c0_19], %23 {strides = array<i32>} : memref<1x16x32xf32, #tpu.memory_space<vmem>>, vector<1x16x32xf32>,
    return
  }
  func.func @transform_0(%arg0: i32, %arg1: i32) -> (i32, i32, i32) {
    %c0_i32 = arith.constant 0 : i32
    %c0_i32_0 = arith.constant 0 : i32
    return %arg0, %arg1, %c0_i32 : i32, i32, i32
  }
  func.func @transform_1(%arg0: i32, %arg1: i32) -> (i32, i32, i32) {
    %c0_i32 = arith.constant 0 : i32
    %c0_i32_0 = arith.constant 0 : i32
    %c0_i32_1 = arith.constant 0 : i32
    return %arg0, %c0_i32, %c0_i32_0 : i32, i32, i32
  }
  func.func @transform_2(%arg0: i32, %arg1: i32) -> (i32, i32, i32) {
    %c0_i32 = arith.constant 0 : i32
    %c0_i32_0 = arith.constant 0 : i32
    %c0_i32_1 = arith.constant 0 : i32
    return %arg0, %c0_i32, %c0_i32_0 : i32, i32, i32
  }
  func.func @transform_3(%arg0: i32, %arg1: i32) -> (i32, i32, i32) {
    %c0_i32 = arith.constant 0 : i32
    %c0_i32_0 = arith.constant 0 : i32
    %c0_i32_1 = arith.constant 0 : i32
    return %arg0, %c0_i32, %c0_i32_0 : i32, i32, i32
  }
  func.func @transform_4(%arg0: i32, %arg1: i32) -> (i32, i32, i32) {
    %c0_i32 = arith.constant 0 : i32
    %c0_i32_0 = arith.constant 0 : i32
    %c0_i32_1 = arith.constant 0 : i32
    return %arg0, %c0_i32, %c0_i32_0 : i32, i32, i32
  }
  func.func @transform_5(%arg0: i32, %arg1: i32) -> (i32, i32, i32) {
    %c0_i32 = arith.constant 0 : i32
    %c0_i32_0 = arith.constant 0 : i32
    return %arg0, %arg1, %c0_i32 : i32, i32, i32
  }
}

</mosaic_0001>

<llo_original>
// kernel: tpu_custom_call.1
$region0: #{tpu_custom_call.1}
  #allocation0 [shape = 'u32[]', space=smem, size = 0x4, offset = 0x4, fixed_abs, tag = 'smem constant byte address 0x4 - core index']
  #allocation1 [shape = 'u32[144,128]{1,0:T(1,128)}', space=vmem, size = 0x12000, scoped, tag = 'internal scratch']
  %s0 = inlined_call_operand.vmem [shape: f32[4,16,8], index: 0, kind: input, shape index: {}]
  %s1 = inlined_call_operand.vmem [shape: f32[4,8,16], index: 1, kind: input, shape index: {}]
  %s2 = inlined_call_operand.vmem [shape: f32[4,1,16], index: 2, kind: input, shape index: {}]
  %s3 = inlined_call_operand.vmem [shape: f32[4,16,32], index: 3, kind: input, shape index: {}]
  %s4 = inlined_call_operand.hbm [shape: f32[4,1,32], index: 4, kind: input, shape index: {}]
  %s5 = inlined_call_operand.hbm [shape: f32[4,16,32], index: 5, kind: output, shape index: {}]
  %s6 = sld [smem:[#allocation0]]
  $region57: #{tpu_custom_call.1} parent=0
    _
  %s8 = ssub.s32 1, %s6
  %s9 = scalar_select 0, %s8, %s6
  $region1: #{tpu_custom_call.1} parent=0
    #allocation2 [shape = 'u8[1024]{0}', space=vmem, size = 0x400, scoped, tag = 'input window, operand 4']
    #allocation3 [shape = 's32[2]{0}', space=sflag, size = 0x8, scoped, tag = 'scoped memory for tpu_custom_call.1']
    #allocation4 [shape = 's32[2]{0}', space=sflag, size = 0x8, scoped, tag = 'scoped memory for tpu_custom_call.1']
    #allocation5 [shape = 'u8[16384]{0}', space=vmem, size = 0x4000, scoped, tag = 'output window, operand 0']
    %10 = vsyncpa [#allocation3], 0
    %s11 = scalar_lea.sflag [#allocation3], 1
    %12 = vsyncpa %s11, 0
    %13 = vsyncpa [#allocation4], 0
    %s14 = scalar_lea.sflag [#allocation4], 1
    %15 = vsyncpa %s14, 0
    loop: start=0, step=1, limit=6
    $region2: #{tpu_custom_call.1} parent=1 // loop_pre_header
      _
    $region3: #{tpu_custom_call.1} parent=1 // loop_header
      %s17 = sphi 0, %s21
      %p18 = scmp.ge.s32.totalorder %s17, 6
      %s24 = sphi 0, %s36
      %s25 = sphi 0, %s32
      %s26 = sphi 0, %s24
      %s27 = sphi 0, %s25
      %s28 = sphi 0, %s26
      %s29 = sphi 0, %s27
      %s41 = sphi 0, %s43
      %s44 = sphi 0, %s41
      %s45 = sphi 0, %s44
      %s61 = sphi 0, %s45
      %s67 = sphi 0, %s69
      %s70 = sphi 0, %s67
      %s71 = sphi 0, %s70
      %s87 = sphi 0, %s71
      %s93 = sphi 0, %s95
      %s96 = sphi 0, %s93
      %s97 = sphi 0, %s96
      %s113 = sphi 0, %s97
      %s119 = sphi 0, %s121
      %s122 = sphi 0, %s119
      %s123 = sphi 0, %s122
      %s139 = sphi 0, %s123
      %s145 = sphi 0, %s147
      %s148 = sphi 0, %s145
      %s149 = sphi 0, %s148
      %s165 = sphi 0, %s149
      %s173 = sphi 0, %s175
      %s176 = sphi 0, %s173
      %s177 = sphi 0, %s176
      %s193 = sphi 0, %s177
    $region4: #{tpu_custom_call.1} parent=1 // loop_header_branch
      %20 = sbr.rel (%p18) target = $region8
    $region5: #{tpu_custom_call.1} parent=1 // loop_body
      %s22 = ssub.s32 %s17, 1
      %s23 = ssub.s32 %s17, 2
      %s30 = sadd.s32 1, %s25
      %p31 = scmp.ge.s32.totalorder %s30, 1
      %s32 = scalar_select %p31, 0, %s30
      %s33 = sadd.s32 1, %s24
      %s34 = scalar_select %p31, %s33, %s24
      %p35 = scmp.ge.s32.totalorder %s34, 4
      %s36 = scalar_select %p35, 0, %s34
      %s37 = ssub.s32 %s24, %s36
      %s38 = ssub.s32 %s25, %s32
      %s39 = sor.u32 %s37, %s38
      %p40 = scmp.eq.s32.totalorder %s39, 0
      %s42 = sadd.s32 %s41, 1
      %s43 = scalar_select %p40, %s41, %s42
      %p46 = pneg %p40
      %p47 = scmp.eq.s32.totalorder %s17, 3
      %p48 = por %p46, %p47
      %p49 = scmp.ne.s32.totalorder %s41, %s44
      %p50 = scmp.eq.s32.totalorder %s17, 0
      %p51 = por %p49, %p50
      %p52 = scmp.ne.s32.totalorder %s41, %s44
      %p53 = scmp.eq.s32.totalorder %s22, 3
      %p54 = por %p52, %p53
      %p55 = scmp.ne.s32.totalorder %s44, %s45
      %p56 = scmp.eq.s32.totalorder %s22, 0
      %p57 = por %p55, %p56
      %p58 = scmp.ne.s32.totalorder %s44, %s45
      %p59 = scmp.eq.s32.totalorder %s23, 3
      %p60 = por %p58, %p59
      %p62 = scmp.ne.s32.totalorder %s45, %s61
      %p63 = scmp.eq.s32.totalorder %s23, 0
      %p64 = por %p62, %p63
      %s65 = ssub.s32 %s24, %s36
      %p66 = scmp.eq.s32.totalorder %s65, 0
      %s68 = sadd.s32 %s67, 1
      %s69 = scalar_select %p66, %s67, %s68
      %p72 = pneg %p66
      %p73 = scmp.eq.s32.totalorder %s17, 3
      %p74 = por %p72, %p73
      %p75 = scmp.ne.s32.totalorder %s67, %s70
      %p76 = scmp.eq.s32.totalorder %s17, 0
      %p77 = por %p75, %p76
      %p78 = scmp.ne.s32.totalorder %s67, %s70
      %p79 = scmp.eq.s32.totalorder %s22, 3
      %p80 = por %p78, %p79
      %p81 = scmp.ne.s32.totalorder %s70, %s71
      %p82 = scmp.eq.s32.totalorder %s22, 0
      %p83 = por %p81, %p82
      %p84 = scmp.ne.s32.totalorder %s70, %s71
      %p85 = scmp.eq.s32.totalorder %s23, 3
      %p86 = por %p84, %p85
      %p88 = scmp.ne.s32.totalorder %s71, %s87
      %p89 = scmp.eq.s32.totalorder %s23, 0
      %p90 = por %p88, %p89
      %s91 = ssub.s32 %s24, %s36
      %p92 = scmp.eq.s32.totalorder %s91, 0
      %s94 = sadd.s32 %s93, 1
      %s95 = scalar_select %p92, %s93, %s94
      %p98 = pneg %p92
      %p99 = scmp.eq.s32.totalorder %s17, 3
      %p100 = por %p98, %p99
      %p101 = scmp.ne.s32.totalorder %s93, %s96
      %p102 = scmp.eq.s32.totalorder %s17, 0
      %p103 = por %p101, %p102
      %p104 = scmp.ne.s32.totalorder %s93, %s96
      %p105 = scmp.eq.s32.totalorder %s22, 3
      %p106 = por %p104, %p105
      %p107 = scmp.ne.s32.totalorder %s96, %s97
      %p108 = scmp.eq.s32.totalorder %s22, 0
      %p109 = por %p107, %p108
      %p110 = scmp.ne.s32.totalorder %s96, %s97
      %p111 = scmp.eq.s32.totalorder %s23, 3
      %p112 = por %p110, %p111
      %p114 = scmp.ne.s32.totalorder %s97, %s113
      %p115 = scmp.eq.s32.totalorder %s23, 0
      %p116 = por %p114, %p115
      %s117 = ssub.s32 %s24, %s36
      %p118 = scmp.eq.s32.totalorder %s117, 0
      %s120 = sadd.s32 %s119, 1
      %s121 = scalar_select %p118, %s119, %s120
      %p124 = pneg %p118
      %p125 = scmp.eq.s32.totalorder %s17, 3
      %p126 = por %p124, %p125
      %p127 = scmp.ne.s32.totalorder %s119, %s122
      %p128 = scmp.eq.s32.totalorder %s17, 0
      %p129 = por %p127, %p128
      %p130 = scmp.ne.s32.totalorder %s119, %s122
      %p131 = scmp.eq.s32.totalorder %s22, 3
      %p132 = por %p130, %p131
      %p133 = scmp.ne.s32.totalorder %s122, %s123
      %p134 = scmp.eq.s32.totalorder %s22, 0
      %p135 = por %p133, %p134
      %p136 = scmp.ne.s32.totalorder %s122, %s123
      %p137 = scmp.eq.s32.totalorder %s23, 3
      %p138 = por %p136, %p137
      %p140 = scmp.ne.s32.totalorder %s123, %s139
      %p141 = scmp.eq.s32.totalorder %s23, 0
      %p142 = por %p140, %p141
      %s143 = ssub.s32 %s24, %s36
      %p144 = scmp.eq.s32.totalorder %s143, 0
      %s146 = sadd.s32 %s145, 1
      %s147 = scalar_select %p144, %s145, %s146
      %p150 = pneg %p144
      %p151 = scmp.eq.s32.totalorder %s17, 3
      %p152 = por %p150, %p151
      %p153 = scmp.ne.s32.totalorder %s145, %s148
      %p154 = scmp.eq.s32.totalorder %s17, 0
      %p155 = por %p153, %p154
      %p156 = scmp.ne.s32.totalorder %s145, %s148
      %p157 = scmp.eq.s32.totalorder %s22, 3
      %p158 = por %p156, %p157
      %p159 = scmp.ne.s32.totalorder %s148, %s149
      %p160 = scmp.eq.s32.totalorder %s22, 0
      %p161 = por %p159, %p160
      %p162 = scmp.ne.s32.totalorder %s148, %s149
      %p163 = scmp.eq.s32.totalorder %s23, 3
      %p164 = por %p162, %p163
      %p166 = scmp.ne.s32.totalorder %s149, %s165
      %p167 = scmp.eq.s32.totalorder %s23, 0
      %p168 = por %p166, %p167
      %s169 = ssub.s32 %s24, %s36
      %s170 = ssub.s32 %s25, %s32
      %s171 = sor.u32 %s169, %s170
      %p172 = scmp.eq.s32.totalorder %s171, 0
      %s174 = sadd.s32 %s173, 1
      %s175 = scalar_select %p172, %s173, %s174
      %p178 = pneg %p172
      %p179 = scmp.eq.s32.totalorder %s17, 3
      %p180 = por %p178, %p179
      %p181 = scmp.ne.s32.totalorder %s173, %s176
      %p182 = scmp.eq.s32.totalorder %s17, 0
      %p183 = por %p181, %p182
      %p184 = scmp.ne.s32.totalorder %s173, %s176
      %p185 = scmp.eq.s32.totalorder %s22, 3
      %p186 = por %p184, %p185
      %p187 = scmp.ne.s32.totalorder %s176, %s177
      %p188 = scmp.eq.s32.totalorder %s22, 0
      %p189 = por %p187, %p188
      %p190 = scmp.ne.s32.totalorder %s176, %s177
      %p191 = scmp.eq.s32.totalorder %s23, 3
      %p192 = por %p190, %p191
      %p194 = scmp.ne.s32.totalorder %s177, %s193
      %p195 = scmp.eq.s32.totalorder %s23, 0
      %p196 = por %p194, %p195
      %p197 = scmp.le.s32.totalorder 1, %s17
      %p198 = scmp.lt.s32.totalorder %s17, 5
      %p199 = pnand %p197, %p198
      %p200 = pneg %p199
      // Predicated region
      $region9: #{tpu_custom_call.1} parent=5 // pred_check
        _
      $region10: #{tpu_custom_call.1} parent=5 // pred_check_branch
        %202 = sbr.rel (%p199) target = $region12
      $region11: #{tpu_custom_call.1} parent=5 // pred_region
        %s203 = ssub.s32 %s17, 1
      $region12: #{tpu_custom_call.1} parent=5 // pred_fallthru
        _
      %p204 = scmp.lt.s32.totalorder %s17, 4
      // Predicated region
      $region13: #{tpu_custom_call.1} parent=5 // pred_check
        %p205 = pneg %p204
      $region14: #{tpu_custom_call.1} parent=5 // pred_check_branch
        %207 = sbr.rel (%p205) target = $region16
      $region15: #{tpu_custom_call.1} parent=5 // pred_region
        // Predicated region
        $region17: #{tpu_custom_call.1} parent=15 // pred_check
          %p208 = pneg %p51
        $region18: #{tpu_custom_call.1} parent=15 // pred_check_branch
          %210 = sbr.rel (%p208) target = $region20
        $region19: #{tpu_custom_call.1} parent=15 // pred_region
          %s211 = smul.u32 2, %s25
          %p212 = scmp.lt.s32.totalorder %s24, 3
          %s213 = scalar_select %p212, %s24, 3
          %p214 = scmp.lt.s32.totalorder %s211, 1
          %s215 = scalar_select %p214, %s211, 1
          %s216 = smul.addr %s213, 2
          %s217 = sadd.s32 %s215, %s216
          %s218 = smul.addr %s217, 8
          %s219 = scalar_lea.vmem %s0, %s218
          %s220 = smul.u32 2, %s25
        $region20: #{tpu_custom_call.1} parent=15 // pred_fallthru
          _
        // Predicated region
        $region21: #{tpu_custom_call.1} parent=15 // pred_check
          %p221 = pneg %p77
        $region22: #{tpu_custom_call.1} parent=15 // pred_check_branch
          %223 = sbr.rel (%p221) target = $region24
        $region23: #{tpu_custom_call.1} parent=15 // pred_region
          %p224 = scmp.lt.s32.totalorder %s24, 3
          %s225 = scalar_select %p224, %s24, 3
          %s226 = smul.addr %s225, 8
          %s227 = scalar_lea.vmem %s1, %s226
        $region24: #{tpu_custom_call.1} parent=15 // pred_fallthru
          _
        // Predicated region
        $region25: #{tpu_custom_call.1} parent=15 // pred_check
          %p228 = pneg %p103
        $region26: #{tpu_custom_call.1} parent=15 // pred_check_branch
          %230 = sbr.rel (%p228) target = $region28
        $region27: #{tpu_custom_call.1} parent=15 // pred_region
          %p231 = scmp.lt.s32.totalorder %s24, 3
          %s232 = scalar_select %p231, %s24, 3
          %s233 = scalar_lea.vmem %s2, %s232
        $region28: #{tpu_custom_call.1} parent=15 // pred_fallthru
          _
        // Predicated region
        $region29: #{tpu_custom_call.1} parent=15 // pred_check
          %p234 = pneg %p129
        $region30: #{tpu_custom_call.1} parent=15 // pred_check_branch
          %236 = sbr.rel (%p234) target = $region32
        $region31: #{tpu_custom_call.1} parent=15 // pred_region
          %p237 = scmp.lt.s32.totalorder %s24, 3
          %s238 = scalar_select %p237, %s24, 3
          %s239 = smul.addr %s238, 2
          %s240 = smul.addr %s239, 8
          %s241 = scalar_lea.vmem %s3, %s240
        $region32: #{tpu_custom_call.1} parent=15 // pred_fallthru
          _
        // Predicated region
        $region33: #{tpu_custom_call.1} parent=15 // pred_check
          %p242 = pneg %p155
        $region34: #{tpu_custom_call.1} parent=15 // pred_check_branch
          %244 = sbr.rel (%p242) target = $region36
        $region35: #{tpu_custom_call.1} parent=15 // pred_region
          %s245 = sand.u32 %s145, 1
          %s246 = scalar_lea.sflag [#allocation3], %s245
          %s247 = sand.u32 %s145, 1
          %s248 = scalar_lea.vmem [#allocation2], %s247
          %s250 = ssub.s32 16, 16
          %251 = vsyncadd %s246, %s250
          %s252 = smul.addr %s24, 16
          %s253 = scalar_lea.hbm %s4, %s252
          %s255 = sshll.u32 %s248, 4
          %s256 = int_to_ptr.vmem [resolvable:$true] %s255
          %258 = dma.hbm_to_vmem [thread:$0]  %s253, 16, %s256, %s246
        $region36: #{tpu_custom_call.1} parent=15 // pred_fallthru
          _
      $region16: #{tpu_custom_call.1} parent=5 // pred_fallthru
        _
      %p259 = scmp.le.s32.totalorder 1, %s17
      %p260 = scmp.lt.s32.totalorder %s17, 5
      %p261 = pnand %p259, %p260
      %p262 = pneg %p261
      // Predicated region
      $region37: #{tpu_custom_call.1} parent=5 // pred_check
        _
      $region38: #{tpu_custom_call.1} parent=5 // pred_check_branch
        %264 = sbr.rel (%p261) target = $region40
      $region39: #{tpu_custom_call.1} parent=5 // pred_region
        %s265 = ssub.s32 %s17, 1
        %s266 = sand.u32 %s148, 1
        %s267 = scalar_lea.sflag [#allocation3], %s266
        %s268 = sand.u32 %s148, 1
        %s269 = scalar_lea.vmem [#allocation2], %s268
        // Predicated region
        $region41: #{tpu_custom_call.1} parent=39 // pred_check
          %p270 = pneg %p161
        $region42: #{tpu_custom_call.1} parent=39 // pred_check_branch
          %272 = sbr.rel (%p270) target = $region44
        $region43: #{tpu_custom_call.1} parent=39 // pred_region
          %273 = dma.done %s267, 16
        $region44: #{tpu_custom_call.1} parent=39 // pred_fallthru
          _
        %s274 = smul.u32 2, %s27
        %p275 = scmp.lt.s32.totalorder %s26, 3
        %s276 = scalar_select %p275, %s26, 3
        %p277 = scmp.lt.s32.totalorder %s274, 1
        %s278 = scalar_select %p277, %s274, 1
        %s279 = smul.addr %s276, 2
        %s280 = sadd.s32 %s278, %s279
        %s281 = smul.addr %s280, 8
        %s282 = scalar_lea.vmem %s0, %s281
        %p283 = pneg %p57
        %p284 = pneg %p54
        %p285 = scmp.lt.s32.totalorder %s26, 3
        %s286 = scalar_select %p285, %s26, 3
        %s287 = smul.addr %s286, 8
        %s288 = scalar_lea.vmem %s1, %s287
        %p289 = pneg %p83
        %p290 = pneg %p80
        %p291 = scmp.lt.s32.totalorder %s26, 3
        %s292 = scalar_select %p291, %s26, 3
        %s293 = scalar_lea.vmem %s2, %s292
        %p294 = pneg %p109
        %p295 = pneg %p106
        %p296 = scmp.lt.s32.totalorder %s26, 3
        %s297 = scalar_select %p296, %s26, 3
        %s298 = smul.addr %s297, 2
        %s299 = smul.addr %s298, 8
        %s300 = scalar_lea.vmem %s3, %s299
        %p301 = pneg %p135
        %p302 = pneg %p132
        %s303 = sand.u32 %s148, 1
        %s304 = scalar_lea.sflag [#allocation3], %s303
        %s305 = sand.u32 %s148, 1
        %s306 = scalar_lea.vmem [#allocation2], %s305
        %p307 = pneg %p161
        %p308 = pneg %p158
        %p309 = pneg %p189
        %p310 = pneg %p186
        %s311 = sand.u32 %s176, 1
        %s312 = scalar_lea.sflag [#allocation4], %s311
        %s313 = sand.u32 %s176, 1
        %s314 = smul.addr %s313, 16
        %s315 = scalar_lea.vmem [#allocation5], %s314
        %s316 = smul.u32 2, %s27
        %p317 = scmp.lt.s32.totalorder %s26, 3
        %s318 = scalar_select %p317, %s26, 3
        %p319 = scmp.lt.s32.totalorder %s316, 1
        %s320 = scalar_select %p319, %s316, 1
        %s321 = smul.addr %s318, 2
        %s322 = sadd.s32 %s320, %s321
        %s323 = smul.addr %s322, 8
        %s324 = scalar_lea.vmem %s0, %s323
        %s325 = smul.u32 2, %s27
        %p326 = scmp.lt.s32.totalorder %s26, 3
        %s327 = scalar_select %p326, %s26, 3
        %s328 = smul.addr %s327, 8
        %s329 = scalar_lea.vmem %s1, %s328
        %p330 = scmp.lt.s32.totalorder %s26, 3
        %s331 = scalar_select %p330, %s26, 3
        %s332 = scalar_lea.vmem %s2, %s331
        %p333 = scmp.lt.s32.totalorder %s26, 3
        %s334 = scalar_select %p333, %s26, 3
        %s335 = smul.addr %s334, 2
        %s336 = smul.addr %s335, 8
        %s337 = scalar_lea.vmem %s3, %s336
        %s338 = smul.u32 2, %s27
        %v339 = vld [vmem:[%s324] sm:$0xff]
        %v340 = vld [vmem:[%s324 + $0x8] sm:$0xff]
        %v341 = vld [vmem:[%s329] sm:$0xff]
        %v342 = vld [vmem:[%s332] sm:$0x1]
        %v344 = vlaneseq
        %v345 = vshrl.u32 %v344, 7
        %v346 = vsub.s32 0, %v345
        %v347 = vrot.slane %v342, %v346
        %vm349 = vcmask 64512
        %v351 = vsel %vm349, %v339, 0
        %v354 = vsel %vm349, %v340, 0
        %356 = vmatprep.subr.mxu0 0.0
        %357 = vmatpush1.msra.mxu0 0.0
        %358 = vmatprep.subr.mxu0 0.0
        %359 = vmatpush1.msra.mxu0 0.0
        %360 = vmatprep.subr.mxu0 0.0
        %361 = vmatpush1.msra.mxu0 0.0
        %362 = vmatprep.subr.mxu0 0.0
        %363 = vmatpush1.msra.mxu0 0.0
        %364 = vmatprep.subr.mxu0 0.0
        %365 = vmatpush1.msra.mxu0 0.0
        %366 = vmatprep.subr.mxu0 0.0
        %367 = vmatpush1.msra.mxu0 0.0
        %368 = vmatprep.subr.mxu0 0.0
        %369 = vmatpush1.msra.mxu0 0.0
        %370 = vmatprep.subr.mxu0 0.0
        %371 = vmatpush1.msra.mxu0 0.0
        %372 = vmatprep.subr.mxu0 0.0
        %373 = vmatpush1.msra.mxu0 0.0
        %374 = vmatprep.subr.mxu0 0.0
        %375 = vmatpush1.msra.mxu0 0.0
        %376 = vmatprep.subr.mxu0 0.0
        %377 = vmatpush1.msra.mxu0 0.0
        %378 = vmatprep.subr.mxu0 0.0
        %379 = vmatpush1.msra.mxu0 0.0
        %380 = vmatprep.subr.mxu0 0.0
        %381 = vmatpush1.msra.mxu0 0.0
        %382 = vmatprep.subr.mxu0 0.0
        %383 = vmatpush1.msra.mxu0 0.0
        %384 = vmatprep.subr.mxu0 0.0
        %385 = vmatpush1.msra.mxu0 0.0
        %386 = vmatprep.subr.mxu0 0.0
        %387 = vmatpush1.msra.mxu0 %v341
        %388 = vmatprep.subr.mxu0 0.0
        %389 = vmatpush2.msra.mxu0 0.0
        %390 = vmatprep.subr.mxu0 0.0
        %391 = vmatpush2.msra.mxu0 0.0
        %392 = vmatprep.subr.mxu0 0.0
        %393 = vmatpush2.msra.mxu0 0.0
        %394 = vmatprep.subr.mxu0 0.0
        %395 = vmatpush2.msra.mxu0 0.0
        %396 = vmatprep.subr.mxu0 0.0
        %397 = vmatpush2.msra.mxu0 0.0
        %398 = vmatprep.subr.mxu0 0.0
        %399 = vmatpush2.msra.mxu0 0.0
        %400 = vmatprep.subr.mxu0 0.0
        %401 = vmatpush2.msra.mxu0 0.0
        %402 = vmatprep.subr.mxu0 0.0
        %403 = vmatpush2.msra.mxu0 0.0
        %404 = vmatprep.subr.mxu0 0.0
        %405 = vmatpush2.msra.mxu0 0.0
        %406 = vmatprep.subr.mxu0 0.0
        %407 = vmatpush2.msra.mxu0 0.0
        %408 = vmatprep.subr.mxu0 0.0
        %409 = vmatpush2.msra.mxu0 0.0
        %410 = vmatprep.subr.mxu0 0.0
        %411 = vmatpush2.msra.mxu0 0.0
        %412 = vmatprep.subr.mxu0 0.0
        %413 = vmatpush2.msra.mxu0 0.0
        %414 = vmatprep.subr.mxu0 0.0
        %415 = vmatpush2.msra.mxu0 0.0
        %416 = vmatprep.subr.mxu0 0.0
        %417 = vmatpush2.msra.mxu0 0.0
        %418 = vmatprep.subr.mxu0 0.0
        %419 = vmatpush2.msra.mxu0 0.0
        %420 = vmatprep.mubr.f32.mxu0 0.0
        %421 = vmatmul.mubr.f32.gmra.mxu0 %v351
        %v422 = vpop.f32.mrf.mxu0
        %v423 = vadd.f32 %v347, %v422
        %v424 = vpop.f32.mrf.mxu0
        %425 = vmatprep.mubr.f32.mxu0 0.0
        %426 = vmatmul.mubr.f32.gmra.mxu0 %v354
        %v427 = vpop.f32.mrf.mxu0
        %v428 = vadd.f32 %v347, %v427
        %v429 = vpop.f32.mrf.mxu0
        %430 = vdwg.mxu0
        %vm431 = vcmp.gt.f32.partialorder %v423, 0.0
        %vm432 = vcmp.gt.f32.partialorder %v428, 0.0
        %v433 = vmul.f32 %v423, 0.01
        %v434 = vmul.f32 %v428, 0.01
        %v435 = vsel %vm431, %v423, %v433
        %v436 = vsel %vm432, %v428, %v434
        %v437 = vld [vmem:[%s337] sm:$0xff]
        %v438 = vld [vmem:[%s337 + $0x8] sm:$0xff]
        %v439 = vld [vmem:[%s269] sm:$0x1]
        %v441 = vlaneseq
        %v442 = vshrl.u32 %v441, 7
        %v443 = vsub.s32 0, %v442
        %v444 = vrot.slane %v439, %v443
        %vm446 = vcmask 130048
        %v448 = vsel %vm446, %v435, 0
        %v451 = vsel %vm446, %v436, 0
        %453 = vmatprep.subr.mxu0 0.0
        %454 = vmatpush1.msra.mxu0 0.0
        %455 = vmatprep.subr.mxu0 0.0
        %456 = vmatpush1.msra.mxu0 0.0
        %457 = vmatprep.subr.mxu0 0.0
        %458 = vmatpush1.msra.mxu0 0.0
        %459 = vmatprep.subr.mxu0 0.0
        %460 = vmatpush1.msra.mxu0 0.0
        %461 = vmatprep.subr.mxu0 0.0
        %462 = vmatpush1.msra.mxu0 0.0
        %463 = vmatprep.subr.mxu0 0.0
        %464 = vmatpush1.msra.mxu0 0.0
        %465 = vmatprep.subr.mxu0 0.0
        %466 = vmatpush1.msra.mxu0 0.0
        %467 = vmatprep.subr.mxu0 0.0
        %468 = vmatpush1.msra.mxu0 0.0
        %469 = vmatprep.subr.mxu0 0.0
        %470 = vmatpush1.msra.mxu0 0.0
        %471 = vmatprep.subr.mxu0 0.0
        %472 = vmatpush1.msra.mxu0 0.0
        %473 = vmatprep.subr.mxu0 0.0
        %474 = vmatpush1.msra.mxu0 0.0
        %475 = vmatprep.subr.mxu0 0.0
        %476 = vmatpush1.msra.mxu0 0.0
        %477 = vmatprep.subr.mxu0 0.0
        %478 = vmatpush1.msra.mxu0 0.0
        %479 = vmatprep.subr.mxu0 0.0
        %480 = vmatpush1.msra.mxu0 0.0
        %481 = vmatprep.subr.mxu0 0.0
        %482 = vmatpush1.msra.mxu0 %v438
        %483 = vmatprep.subr.mxu0 0.0
        %484 = vmatpush1.msra.mxu0 %v437
        %485 = vmatprep.subr.mxu0 0.0
        %486 = vmatpush2.msra.mxu0 0.0
        %487 = vmatprep.subr.mxu0 0.0
        %488 = vmatpush2.msra.mxu0 0.0
        %489 = vmatprep.subr.mxu0 0.0
        %490 = vmatpush2.msra.mxu0 0.0
        %491 = vmatprep.subr.mxu0 0.0
        %492 = vmatpush2.msra.mxu0 0.0
        %493 = vmatprep.subr.mxu0 0.0
        %494 = vmatpush2.msra.mxu0 0.0
        %495 = vmatprep.subr.mxu0 0.0
        %496 = vmatpush2.msra.mxu0 0.0
        %497 = vmatprep.subr.mxu0 0.0
        %498 = vmatpush2.msra.mxu0 0.0
        %499 = vmatprep.subr.mxu0 0.0
        %500 = vmatpush2.msra.mxu0 0.0
        %501 = vmatprep.subr.mxu0 0.0
        %502 = vmatpush2.msra.mxu0 0.0
        %503 = vmatprep.subr.mxu0 0.0
        %504 = vmatpush2.msra.mxu0 0.0
        %505 = vmatprep.subr.mxu0 0.0
        %506 = vmatpush2.msra.mxu0 0.0
        %507 = vmatprep.subr.mxu0 0.0
        %508 = vmatpush2.msra.mxu0 0.0
        %509 = vmatprep.subr.mxu0 0.0
        %510 = vmatpush2.msra.mxu0 0.0
        %511 = vmatprep.subr.mxu0 0.0
        %512 = vmatpush2.msra.mxu0 0.0
        %513 = vmatprep.subr.mxu0 0.0
        %514 = vmatpush2.msra.mxu0 0.0
        %515 = vmatprep.subr.mxu0 0.0
        %516 = vmatpush2.msra.mxu0 0.0
        %517 = vmatprep.mubr.f32.mxu0 0.0
        %518 = vmatmul.mubr.f32.gmra.mxu0 %v448
        %v519 = vpop.f32.mrf.mxu0
        %v520 = vadd.f32 %v444, %v519
        %v521 = vpop.f32.mrf.mxu0
        %522 = vmatprep.mubr.f32.mxu0 0.0
        %523 = vmatmul.mubr.f32.gmra.mxu0 %v451
        %v524 = vpop.f32.mrf.mxu0
        %v525 = vadd.f32 %v444, %v524
        %v526 = vpop.f32.mrf.mxu0
        %527 = vdwg.mxu0
        %vm528 = vcmask 261120
        %529 = vst.msk [vmem:[%s315] sm:$0xff] %vm528, %v520
        %530 = vst.msk [vmem:[%s315 + $0x8] sm:$0xff] %vm528, %v525
        %s531 = sand.u32 %s176, 1
        %s532 = scalar_lea.sflag [#allocation4], %s531
        %s533 = sand.u32 %s176, 1
        %s534 = smul.addr %s533, 16
        %s535 = scalar_lea.vmem [#allocation5], %s534
        // Predicated region
        $region45: #{tpu_custom_call.1} parent=39 // pred_check
          %p536 = pneg %p186
        $region46: #{tpu_custom_call.1} parent=39 // pred_check_branch
          %538 = sbr.rel (%p536) target = $region48
        $region47: #{tpu_custom_call.1} parent=39 // pred_region
          %s539 = smul.u32 2, %s27
          %s541 = ssub.s32 256, 256
          %542 = vsyncadd %s532, %s541
          %s543 = smul.addr %s26, 2
          %s544 = sadd.s32 %s539, %s543
          %s545 = smul.addr %s544, 128
          %s546 = scalar_lea.hbm %s5, %s545
          %s547 = sshll.u32 %s535, 4
          %s548 = int_to_ptr.vmem [resolvable:$true] %s547
          %553 = dma.vmem_to_hbm [thread:$0]  %s548, 256, %s546, %s532, 128, 128, 8
        $region48: #{tpu_custom_call.1} parent=39 // pred_fallthru
          _
      $region40: #{tpu_custom_call.1} parent=5 // pred_fallthru
        _
      %p554 = scmp.le.s32.totalorder 2, %s17
      // Predicated region
      $region49: #{tpu_custom_call.1} parent=5 // pred_check
        %p555 = pneg %p554
      $region50: #{tpu_custom_call.1} parent=5 // pred_check_branch
        %557 = sbr.rel (%p555) target = $region52
      $region51: #{tpu_custom_call.1} parent=5 // pred_region
        %s558 = ssub.s32 %s17, 2
        // Predicated region
        $region53: #{tpu_custom_call.1} parent=51 // pred_check
          %p559 = pneg %p192
        $region54: #{tpu_custom_call.1} parent=51 // pred_check_branch
          %561 = sbr.rel (%p559) target = $region56
        $region55: #{tpu_custom_call.1} parent=51 // pred_region
          %s562 = sand.u32 %s177, 1
          %s563 = scalar_lea.sflag [#allocation4], %s562
          %s564 = sand.u32 %s177, 1
          %s565 = smul.addr %s564, 16
          %s566 = scalar_lea.vmem [#allocation5], %s565
          %567 = dma.done %s563, 256
        $region56: #{tpu_custom_call.1} parent=51 // pred_fallthru
          _
      $region52: #{tpu_custom_call.1} parent=5 // pred_fallthru
        _
    $region6: #{tpu_custom_call.1} parent=1 // loop_footer
      %s21 = sadd.s32 1, %s17
    $region7: #{tpu_custom_call.1} parent=1 // loop_footer_branch
      %16 = sbr.rel target = $region3
    $region8: #{tpu_custom_call.1} parent=1 // loop_exit
      _
    %568 = vsyncpa [#allocation3], 1
    %s569 = scalar_lea.sflag [#allocation3], 1
    %570 = vsyncpa %s569, 1
    %571 = vsyncpa [#allocation4], 1
    %s572 = scalar_lea.sflag [#allocation4], 1
    %573 = vsyncpa %s572, 1

</llo_original>
